<compile_context>
chip_gen: v5e
topology: v5e:2x2
jax: 0.10.0
libtpu: 0.0.40
codegen_flags: <defaults>
</compile_context>

<pallas_src>
import math
import functools

import numpy as np
import jax
import jax.numpy as jnp
from jax.experimental import pallas as pl
from jax.experimental.pallas import tpu as pltpu


# Caps the static unroll length of the per-plane vertical loop inside the kernel.
_MAX_PLANES_PER_BLOCK = 64


def _vmem_limit_bytes():
    """Per-generation scoped-VMEM target (leaves headroom below physical capacity:
    v5e/v6e have 128 MiB per TensorCore, v7x only 64 MiB)."""
    try:
        cap = int(pltpu.get_tpu_info().vmem_capacity_bytes)
    except Exception:
        cap = 64 * 1024 * 1024          # conservative (v7x per-core) fallback
    return int(min(cap * 3 // 4, 100 * 1024 * 1024))


def _plan_blocks(M, H, W, vmem_limit):
    """Pick planes-per-block `b` and the grid length so that the double-buffered in/out
    blocks, the f32 intermediate scratch and the two conv matrices fit in `vmem_limit`."""
    bytes_fixed = 2 * 4 * (H * H + W * W)          # Ty + Tx^T (double-buffered f32)
    bytes_per_plane = 4 * H * W * (2 + 2 + 1)      # x dbl-buf + out dbl-buf + scratch
    avail = vmem_limit - bytes_fixed - (4 << 20)   # headroom for compiler temporaries
    b = max(1, avail // bytes_per_plane)
    b = int(min(b, M, _MAX_PLANES_PER_BLOCK))

    # Keep the block's second-minor dim (b*H) a multiple of 8 unless it is the full dim.
    align = 8 // math.gcd(H, 8)
    if b < M:
        b = max(align, (b // align) * align)
        b = min(b, M)

    # Make sure the "parallel" grid has >= 2 steps so both v7x TensorCores get work.
    if M > 1 and pl.cdiv(M, b) < 2:
        half = ((pl.cdiv(M, 2) + align - 1) // align) * align
        if half < M:
            b = half

    return b, pl.cdiv(M, b)


# ---------------------------------------------------------------------------
# Fused kernel: one grid step = `planes` whole (H, W) planes, laid out (planes*H, W).
#   ty_ref  : (H, H)  vertical conv matrix (replicate padding folded in), constant block
#   txT_ref : (W, W)  horizontal conv matrix, pre-transposed, constant block
#   x_ref   : (planes*H, W) input planes        o_ref : (planes*H, W) output planes
#   tmp_ref : (planes*H, W) f32 VMEM scratch for the horizontally-blurred intermediate
# ---------------------------------------------------------------------------
def _fused_blur_kernel(ty_ref, txT_ref, x_ref, o_ref, tmp_ref, *, planes, rows):
    # Pass 1 (horizontal blur): a single merged right-multiply over every row of every
    # plane in the block -- one lane-dense MXU matmul, intermediate stays in VMEM.
    tmp_ref[...] = jnp.dot(x_ref[...], txT_ref[...],
                           preferred_element_type=jnp.float32)

    # Pass 2 (vertical blur): per-plane left-multiply out_p = Ty @ tmp_p.
    # `planes` is a small compile-time constant, so these are static slices.
    for p in range(planes):
        r0 = p * rows
        o_ref[r0:r0 + rows, :] = jnp.dot(
            ty_ref[...], tmp_ref[r0:r0 + rows, :],
            preferred_element_type=jnp.float32,
        ).astype(o_ref.dtype)


def _replicate_conv_matrix(taps, n, pad):
    """(n, n) matrix T with (T @ v)[i] = sum_k taps[k] * v[clip(i - pad + k, 0, n-1)],
    i.e. 1-D cross-correlation with replicate ('edge') padding folded into the matrix."""
    K = taps.shape[0]
    rows = jnp.broadcast_to(jnp.arange(n)[:, None], (n, K))
    cols = jnp.clip(rows - pad + jnp.arange(K)[None, :], 0, n - 1)
    vals = jnp.broadcast_to(taps[None, :], (n, K))
    return jnp.zeros((n, n), jnp.float32).at[rows, cols].add(vals)


def my_blur(x, sigma, kernel_size=9):
    """x: (N, C, H, W), sigma: scalar.  Matches myBlur.forward: sigma -> sigma*8+16,
    normalized Gaussian KxK kernel, depthwise conv with replicate padding (K-1)//2."""
    N, C, H, W = x.shape
    K = kernel_size
    p = (K - 1) // 2
    M = N * C

    # Sigma-dependent separable Gaussian taps (tiny -> plain JAX, no extra pallas_call).
    s = jnp.asarray(sigma, jnp.float32) * 8.0 + 16.0
    variance = s * s
    coords = jnp.arange(K, dtype=jnp.float32) - (K - 1) / 2.0
    taps = jnp.exp(-(coords * coords) / (2.0 * variance))
    taps = taps / jnp.sum(taps)        # outer(taps, taps) == the module's normalized kernel

    # Banded conv matrices with replicate padding folded in (no padded copy of x in HBM).
    Ty = _replicate_conv_matrix(taps, H, p)          # (H, H), left-multiply
    TxT = _replicate_conv_matrix(taps, W, p).T       # (W, W), pre-transposed right-multiply
    # TODO(synk): for very large H,W with K << H (v5e especially), band-block Ty/Tx via a
    # contraction grid axis instead of the dense D-length contraction; and offer a bf16
    # input path when blur tolerance allows.

    # Natural layout: contiguous reshape only (free), W stays in lanes. No transposes.
    x2 = x.astype(jnp.float32).reshape(M * H, W)

    vmem_limit = _vmem_limit_bytes()
    b, grid_len = _plan_blocks(M, H, W, vmem_limit)

    out2 = pl.pallas_call(
        functools.partial(_fused_blur_kernel, planes=b, rows=H),
        out_shape=jax.ShapeDtypeStruct((M * H, W), jnp.float32),
        grid=(grid_len,),
        in_specs=[
            pl.BlockSpec((H, H), lambda i: (0, 0)),      # Ty: same block every step
            pl.BlockSpec((W, W), lambda i: (0, 0)),      # Tx^T: same block every step
            pl.BlockSpec((b * H, W), lambda i: (i, 0)),  # block of b whole planes
        ],
        out_specs=pl.BlockSpec((b * H, W), lambda i: (i, 0)),
        scratch_shapes=[pltpu.VMEM((b * H, W), jnp.float32)],
        compiler_params=pltpu.CompilerParams(
            dimension_semantics=("parallel",),           # independent plane blocks
            vmem_limit_bytes=vmem_limit,
        ),
        cost_estimate=pl.CostEstimate(
            flops=2 * M * H * W * (H + W),
            transcendentals=0,
            bytes_accessed=8 * M * H * W + 4 * (H * H + W * W),
        ),
    )(Ty, TxT, x2)

    return out2.reshape(N, C, H, W).astype(x.dtype)


# ---------------------------------------------------------------------------
# Pure-JAX reference (mirrors the PyTorch forward) for a correctness check
# ---------------------------------------------------------------------------
def ref_blur(x, sigma, kernel_size=9):
    N, C, H, W = x.shape
    K = kernel_size
    p = (K - 1) // 2
    mean = (K - 1) / 2.0
    coords = jnp.arange(K, dtype=jnp.float32)
    xg, yg = jnp.meshgrid(coords, coords, indexing="xy")
    diff = -((xg - mean) ** 2 + (yg - mean) ** 2)
    s = jnp.asarray(sigma, jnp.float32) * 8.0 + 16.0
    var = s * s
    g = (1.0 / (2.0 * math.pi * var)) * jnp.exp(diff / (2.0 * var))
    g = g / jnp.sum(g)
    w = jnp.broadcast_to(g, (C, 1, K, K))
    x_pad = jnp.pad(x, ((0, 0), (0, 0), (p, p), (p, p)), mode="edge")
    return jax.lax.conv_general_dilated(
        x_pad, w, window_strides=(1, 1), padding="VALID",
        dimension_numbers=("NCHW", "OIHW", "NCHW"),
        feature_group_count=C,
        precision=jax.lax.Precision.HIGHEST)


if __name__ == "__main__":
    # Small deterministic example.  Module default kernel_size=121 shrunk to 9 to keep
    # shapes small; N*C = 8 planes -> the planner splits them into 2 grid steps.
    N, C, H, W = 2, 4, 16, 16
    K = 9

    key = jax.random.PRNGKey(0)
    x = jax.random.normal(key, (N, C, H, W), dtype=jnp.float32)
    sigma = 0.1  # scalar conditioning input, as in forward(x, sigma)

    blur = jax.jit(my_blur, static_argnames=("kernel_size",))
    out = jax.block_until_ready(blur(x, sigma, kernel_size=K))

    ref = jax.block_until_ready(ref_blur(x, sigma, kernel_size=K))
    np.testing.assert_allclose(np.asarray(out), np.asarray(ref), rtol=1e-4, atol=1e-4)

    print("KERNEL_OK")
</pallas_src>

<mosaic_0001>
module attributes {stable_mosaic.version = 11 : i64} {
  func.func @_fused_blur_kernel(%arg0: i32, %arg1: memref<16x16xf32, #tpu.memory_space<vmem>>, %arg2: memref<16x16xf32, #tpu.memory_space<vmem>>, %arg3: memref<64x16xf32, #tpu.memory_space<vmem>>, %arg4: memref<64x16xf32, #tpu.memory_space<vmem>>, %arg5: memref<64x16xf32, #tpu.memory_space<vmem>>) attributes {dimension_semantics = [#tpu.dimension_semantics<parallel>], iteration_bounds = array<i64: 2>, scalar_prefetch = 0 : i64, scratch_operands = 1 : i64, tpu.core_type = #tpu.core_type<tc>, window_params = [{pipeline_mode = #tpu.pipeline_mode<synchronous>, transform_indices = @transform_0, window_bounds = array<i64: 16, 16>}, {pipeline_mode = #tpu.pipeline_mode<synchronous>, transform_indices = @transform_1, window_bounds = array<i64: 16, 16>}, {transform_indices = @transform_2, window_bounds = array<i64: 64, 16>}, {transform_indices = @transform_3, window_bounds = array<i64: 64, 16>}]} {
    %c0 = arith.constant 0 : index
    %c0_0 = arith.constant 0 : index
    %0 = vector.load %arg3[%c0, %c0_0] : memref<64x16xf32, #tpu.memory_space<vmem>>, vector<64x16xf32>
    %c0_1 = arith.constant 0 : index
    %c0_2 = arith.constant 0 : index
    %1 = vector.load %arg2[%c0_1, %c0_2] : memref<16x16xf32, #tpu.memory_space<vmem>>, vector<16x16xf32>
    %cst = arith.constant dense<0.000000e+00> : vector<64x16xf32>
    %2 = tpu.matmul %0, %1, %cst {dimension_numbers = #tpu.dot_dimension_numbers<[1], [0], [0], [1], [0, 0, 1, 1], [], []>} : vector<64x16xf32>, vector<16x16xf32>, vector<64x16xf32> -> vector<64x16xf32>
    %c0_3 = arith.constant 0 : index
    %c0_4 = arith.constant 0 : index
    %3 = vector.load %arg5[%c0_3, %c0_4] : memref<64x16xf32, #tpu.memory_space<vmem>>, vector<64x16xf32>
    tpu.vector_store %arg5[%c0_3, %c0_4], %2 {strides = array<i32>} : memref<64x16xf32, #tpu.memory_space<vmem>>, vector<64x16xf32>,
    %c0_5 = arith.constant 0 : index
    %c0_6 = arith.constant 0 : index
    %4 = vector.load %arg1[%c0_5, %c0_6] : memref<16x16xf32, #tpu.memory_space<vmem>>, vector<16x16xf32>
    %c0_7 = arith.constant 0 : index
    %c0_8 = arith.constant 0 : index
    %5 = vector.load %arg5[%c0_7, %c0_8] : memref<64x16xf32, #tpu.memory_space<vmem>>, vector<16x16xf32>
    %cst_9 = arith.constant dense<0.000000e+00> : vector<16x16xf32>
    %6 = tpu.matmul %4, %5, %cst_9 {dimension_numbers = #tpu.dot_dimension_numbers<[1], [0], [0], [1], [0, 0, 1, 1], [], []>} : vector<16x16xf32>, vector<16x16xf32>, vector<16x16xf32> -> vector<16x16xf32>
    %c0_10 = arith.constant 0 : index
    %c0_11 = arith.constant 0 : index
    %7 = vector.load %arg4[%c0_10, %c0_11] : memref<64x16xf32, #tpu.memory_space<vmem>>, vector<16x16xf32>
    tpu.vector_store %arg4[%c0_10, %c0_11], %6 {strides = array<i32>} : memref<64x16xf32, #tpu.memory_space<vmem>>, vector<16x16xf32>,
    %c0_12 = arith.constant 0 : index
    %c0_13 = arith.constant 0 : index
    %8 = vector.load %arg1[%c0_12, %c0_13] : memref<16x16xf32, #tpu.memory_space<vmem>>, vector<16x16xf32>
    %c16 = arith.constant 16 : index
    %c0_14 = arith.constant 0 : index
    %9 = vector.load %arg5[%c16, %c0_14] : memref<64x16xf32, #tpu.memory_space<vmem>>, vector<16x16xf32>
    %cst_15 = arith.constant dense<0.000000e+00> : vector<16x16xf32>
    %10 = tpu.matmul %8, %9, %cst_15 {dimension_numbers = #tpu.dot_dimension_numbers<[1], [0], [0], [1], [0, 0, 1, 1], [], []>} : vector<16x16xf32>, vector<16x16xf32>, vector<16x16xf32> -> vector<16x16xf32>
    %c16_16 = arith.constant 16 : index
    %c0_17 = arith.constant 0 : index
    %11 = vector.load %arg4[%c16_16, %c0_17] : memref<64x16xf32, #tpu.memory_space<vmem>>, vector<16x16xf32>
    tpu.vector_store %arg4[%c16_16, %c0_17], %10 {strides = array<i32>} : memref<64x16xf32, #tpu.memory_space<vmem>>, vector<16x16xf32>,
    %c0_18 = arith.constant 0 : index
    %c0_19 = arith.constant 0 : index
    %12 = vector.load %arg1[%c0_18, %c0_19] : memref<16x16xf32, #tpu.memory_space<vmem>>, vector<16x16xf32>
    %c32 = arith.constant 32 : index
    %c0_20 = arith.constant 0 : index
    %13 = vector.load %arg5[%c32, %c0_20] : memref<64x16xf32, #tpu.memory_space<vmem>>, vector<16x16xf32>
    %cst_21 = arith.constant dense<0.000000e+00> : vector<16x16xf32>
    %14 = tpu.matmul %12, %13, %cst_21 {dimension_numbers = #tpu.dot_dimension_numbers<[1], [0], [0], [1], [0, 0, 1, 1], [], []>} : vector<16x16xf32>, vector<16x16xf32>, vector<16x16xf32> -> vector<16x16xf32>
    %c32_22 = arith.constant 32 : index
    %c0_23 = arith.constant 0 : index
    %15 = vector.load %arg4[%c32_22, %c0_23] : memref<64x16xf32, #tpu.memory_space<vmem>>, vector<16x16xf32>
    tpu.vector_store %arg4[%c32_22, %c0_23], %14 {strides = array<i32>} : memref<64x16xf32, #tpu.memory_space<vmem>>, vector<16x16xf32>,
    %c0_24 = arith.constant 0 : index
    %c0_25 = arith.constant 0 : index
    %16 = vector.load %arg1[%c0_24, %c0_25] : memref<16x16xf32, #tpu.memory_space<vmem>>, vector<16x16xf32>
    %c48 = arith.constant 48 : index
    %c0_26 = arith.constant 0 : index
    %17 = vector.load %arg5[%c48, %c0_26] : memref<64x16xf32, #tpu.memory_space<vmem>>, vector<16x16xf32>
    %cst_27 = arith.constant dense<0.000000e+00> : vector<16x16xf32>
    %18 = tpu.matmul %16, %17, %cst_27 {dimension_numbers = #tpu.dot_dimension_numbers<[1], [0], [0], [1], [0, 0, 1, 1], [], []>} : vector<16x16xf32>, vector<16x16xf32>, vector<16x16xf32> -> vector<16x16xf32>
    %c48_28 = arith.constant 48 : index
    %c0_29 = arith.constant 0 : index
    %19 = vector.load %arg4[%c48_28, %c0_29] : memref<64x16xf32, #tpu.memory_space<vmem>>, vector<16x16xf32>
    tpu.vector_store %arg4[%c48_28, %c0_29], %18 {strides = array<i32>} : memref<64x16xf32, #tpu.memory_space<vmem>>, vector<16x16xf32>,
    return
  }
  func.func @transform_0(%arg0: i32) -> (i32, i32) {
    %c0_i32 = arith.constant 0 : i32
    %c0_i32_0 = arith.constant 0 : i32
    %c0_i32_1 = arith.constant 0 : i32
    return %c0_i32, %c0_i32_0 : i32, i32
  }
  func.func @transform_1(%arg0: i32) -> (i32, i32) {
    %c0_i32 = arith.constant 0 : i32
    %c0_i32_0 = arith.constant 0 : i32
    %c0_i32_1 = arith.constant 0 : i32
    return %c0_i32, %c0_i32_0 : i32, i32
  }
  func.func @transform_2(%arg0: i32) -> (i32, i32) {
    %c0_i32 = arith.constant 0 : i32
    %c0_i32_0 = arith.constant 0 : i32
    return %arg0, %c0_i32 : i32, i32
  }
  func.func @transform_3(%arg0: i32) -> (i32, i32) {
    %c0_i32 = arith.constant 0 : i32
    %c0_i32_0 = arith.constant 0 : i32
    return %arg0, %c0_i32 : i32, i32
  }
}

</mosaic_0001>

<llo_original>
// kernel: my_blur.1
$region0: #{my_blur.1}
  #allocation0 [shape = 'u32[]', space=smem, size = 0x4, offset = 0x4, fixed_abs, tag = 'smem constant byte address 0x4 - core index']
  #allocation1 [shape = 'u32[72,128]{1,0:T(1,128)}', space=vmem, size = 0x9000, scoped, tag = 'internal scratch']
  #allocation2 [shape = 'f32[64,16]{1,0:T(8,128)}', space=vmem, size = 0x8000, scoped, tag = 'scratch operand']
  %s0 = inlined_call_operand.vmem [shape: f32[16,16], index: 0, kind: input, shape index: {}]
  %s1 = inlined_call_operand.vmem [shape: f32[16,16], index: 1, kind: input, shape index: {}]
  %s2 = inlined_call_operand.vmem [shape: f32[128,16], index: 2, kind: input, shape index: {}]
  %s3 = inlined_call_operand.hbm [shape: f32[128,16], index: 3, kind: output, shape index: {}]
  %s4 = sld [smem:[#allocation0]]
  $region45: #{my_blur.1} parent=0
    _
  %s6 = ssub.s32 1, %s4
  %s7 = scalar_select 0, %s6, %s4
  $region1: #{my_blur.1} parent=0
    #allocation3 [shape = 'u8[65536]{0}', space=vmem, size = 0x10000, scoped, tag = 'output window, operand 0']
    #allocation4 [shape = 's32[2]{0}', space=sflag, size = 0x8, scoped, tag = 'scoped memory for my_blur.1']
    %8 = vsyncpa [#allocation4], 0
    %s9 = scalar_lea.sflag [#allocation4], 1
    %10 = vsyncpa %s9, 0
    loop: start=0, step=1, limit=4
    $region2: #{my_blur.1} parent=1 // loop_pre_header
      _
    $region3: #{my_blur.1} parent=1 // loop_header
      %s12 = sphi 0, %s16
      %p13 = scmp.ge.s32.totalorder %s12, 4
      %s20 = sphi 0, %s20
      %s22 = sphi 0, %s20
      %s23 = sphi 0, %s22
      %s37 = sphi 0, %s23
      %s41 = sphi 0, %s41
      %s43 = sphi 0, %s41
      %s44 = sphi 0, %s43
      %s58 = sphi 0, %s44
      %s64 = sphi 0, %s66
      %s67 = sphi 0, %s64
      %s68 = sphi 0, %s67
      %s84 = sphi 0, %s68
      %s90 = sphi 0, %s92
      %s93 = sphi 0, %s90
      %s94 = sphi 0, %s93
      %s110 = sphi 0, %s94
    $region4: #{my_blur.1} parent=1 // loop_header_branch
      %15 = sbr.rel (%p13) target = $region8
    $region5: #{my_blur.1} parent=1 // loop_body
      %s17 = ssub.s32 %s12, 1
      %s18 = ssub.s32 %s12, 2
      %s19 = sadd.s32 %s12, 1
      %s21 = sadd.s32 %s20, 1
      %p24 = scmp.eq.s32.totalorder %s12, 1
      %p25 = scmp.ne.s32.totalorder %s20, %s22
      %p26 = scmp.eq.s32.totalorder %s12, 0
      %p27 = por %p25, %p26
      %p28 = scmp.ne.s32.totalorder %s20, %s22
      %p29 = scmp.eq.s32.totalorder %s17, 1
      %p30 = por %p28, %p29
      %p31 = scmp.ne.s32.totalorder %s22, %s23
      %p32 = scmp.eq.s32.totalorder %s17, 0
      %p33 = por %p31, %p32
      %p34 = scmp.ne.s32.totalorder %s22, %s23
      %p35 = scmp.eq.s32.totalorder %s18, 1
      %p36 = por %p34, %p35
      %p38 = scmp.ne.s32.totalorder %s23, %s37
      %p39 = scmp.eq.s32.totalorder %s18, 0
      %p40 = por %p38, %p39
      %s42 = sadd.s32 %s41, 1
      %p45 = scmp.eq.s32.totalorder %s12, 1
      %p46 = scmp.ne.s32.totalorder %s41, %s43
      %p47 = scmp.eq.s32.totalorder %s12, 0
      %p48 = por %p46, %p47
      %p49 = scmp.ne.s32.totalorder %s41, %s43
      %p50 = scmp.eq.s32.totalorder %s17, 1
      %p51 = por %p49, %p50
      %p52 = scmp.ne.s32.totalorder %s43, %s44
      %p53 = scmp.eq.s32.totalorder %s17, 0
      %p54 = por %p52, %p53
      %p55 = scmp.ne.s32.totalorder %s43, %s44
      %p56 = scmp.eq.s32.totalorder %s18, 1
      %p57 = por %p55, %p56
      %p59 = scmp.ne.s32.totalorder %s44, %s58
      %p60 = scmp.eq.s32.totalorder %s18, 0
      %p61 = por %p59, %p60
      %s62 = ssub.s32 %s12, %s19
      %p63 = scmp.eq.s32.totalorder %s62, 0
      %s65 = sadd.s32 %s64, 1
      %s66 = scalar_select %p63, %s64, %s65
      %p69 = pneg %p63
      %p70 = scmp.eq.s32.totalorder %s12, 1
      %p71 = por %p69, %p70
      %p72 = scmp.ne.s32.totalorder %s64, %s67
      %p73 = scmp.eq.s32.totalorder %s12, 0
      %p74 = por %p72, %p73
      %p75 = scmp.ne.s32.totalorder %s64, %s67
      %p76 = scmp.eq.s32.totalorder %s17, 1
      %p77 = por %p75, %p76
      %p78 = scmp.ne.s32.totalorder %s67, %s68
      %p79 = scmp.eq.s32.totalorder %s17, 0
      %p80 = por %p78, %p79
      %p81 = scmp.ne.s32.totalorder %s67, %s68
      %p82 = scmp.eq.s32.totalorder %s18, 1
      %p83 = por %p81, %p82
      %p85 = scmp.ne.s32.totalorder %s68, %s84
      %p86 = scmp.eq.s32.totalorder %s18, 0
      %p87 = por %p85, %p86
      %s88 = ssub.s32 %s12, %s19
      %p89 = scmp.eq.s32.totalorder %s88, 0
      %s91 = sadd.s32 %s90, 1
      %s92 = scalar_select %p89, %s90, %s91
      %p95 = pneg %p89
      %p96 = scmp.eq.s32.totalorder %s12, 1
      %p97 = por %p95, %p96
      %p98 = scmp.ne.s32.totalorder %s90, %s93
      %p99 = scmp.eq.s32.totalorder %s12, 0
      %p100 = por %p98, %p99
      %p101 = scmp.ne.s32.totalorder %s90, %s93
      %p102 = scmp.eq.s32.totalorder %s17, 1
      %p103 = por %p101, %p102
      %p104 = scmp.ne.s32.totalorder %s93, %s94
      %p105 = scmp.eq.s32.totalorder %s17, 0
      %p106 = por %p104, %p105
      %p107 = scmp.ne.s32.totalorder %s93, %s94
      %p108 = scmp.eq.s32.totalorder %s18, 1
      %p109 = por %p107, %p108
      %p111 = scmp.ne.s32.totalorder %s94, %s110
      %p112 = scmp.eq.s32.totalorder %s18, 0
      %p113 = por %p111, %p112
      %p114 = scmp.le.s32.totalorder 1, %s12
      %p115 = scmp.lt.s32.totalorder %s12, 3
      %p116 = pnand %p114, %p115
      %p117 = pneg %p116
      // Predicated region
      $region9: #{my_blur.1} parent=5 // pred_check
        _
      $region10: #{my_blur.1} parent=5 // pred_check_branch
        %119 = sbr.rel (%p116) target = $region12
      $region11: #{my_blur.1} parent=5 // pred_region
        %s120 = ssub.s32 %s12, 1
        // Predicated region
        $region13: #{my_blur.1} parent=11 // pred_check
          %p121 = pneg %p33
        $region14: #{my_blur.1} parent=11 // pred_check_branch
          %123 = sbr.rel (%p121) target = $region16
        $region15: #{my_blur.1} parent=11 // pred_region
          _
        $region16: #{my_blur.1} parent=11 // pred_fallthru
          _
        // Predicated region
        $region17: #{my_blur.1} parent=11 // pred_check
          %p124 = pneg %p54
        $region18: #{my_blur.1} parent=11 // pred_check_branch
          %126 = sbr.rel (%p124) target = $region20
        $region19: #{my_blur.1} parent=11 // pred_region
          _
        $region20: #{my_blur.1} parent=11 // pred_fallthru
          _
      $region12: #{my_blur.1} parent=5 // pred_fallthru
        _
      %p127 = scmp.lt.s32.totalorder %s12, 2
      // Predicated region
      $region21: #{my_blur.1} parent=5 // pred_check
        %p128 = pneg %p127
      $region22: #{my_blur.1} parent=5 // pred_check_branch
        %130 = sbr.rel (%p128) target = $region24
      $region23: #{my_blur.1} parent=5 // pred_region
        // Predicated region
        $region25: #{my_blur.1} parent=23 // pred_check
          %p131 = pneg %p74
        $region26: #{my_blur.1} parent=23 // pred_check_branch
          %133 = sbr.rel (%p131) target = $region28
        $region27: #{my_blur.1} parent=23 // pred_region
          %s134 = smul.u32 8, %s12
          %p135 = scmp.lt.s32.totalorder %s134, 15
          %s136 = scalar_select %p135, %s134, 15
          %s137 = smul.addr %s136, 8
          %s138 = scalar_lea.vmem %s2, %s137
          %s139 = smul.u32 8, %s12
        $region28: #{my_blur.1} parent=23 // pred_fallthru
          _
      $region24: #{my_blur.1} parent=5 // pred_fallthru
        _
      %p140 = scmp.le.s32.totalorder 1, %s12
      %p141 = scmp.lt.s32.totalorder %s12, 3
      %p142 = pnand %p140, %p141
      %p143 = pneg %p142
      // Predicated region
      $region29: #{my_blur.1} parent=5 // pred_check
        _
      $region30: #{my_blur.1} parent=5 // pred_check_branch
        %145 = sbr.rel (%p142) target = $region32
      $region31: #{my_blur.1} parent=5 // pred_region
        %s146 = ssub.s32 %s12, 1
        %p147 = pneg %p33
        %p148 = pneg %p30
        %p149 = pneg %p54
        %p150 = pneg %p51
        %s151 = smul.u32 8, %s17
        %p152 = scmp.lt.s32.totalorder %s151, 15
        %s153 = scalar_select %p152, %s151, 15
        %s154 = smul.addr %s153, 8
        %s155 = scalar_lea.vmem %s2, %s154
        %p156 = pneg %p80
        %p157 = pneg %p77
        %p158 = pneg %p106
        %p159 = pneg %p103
        %s160 = sand.u32 %s93, 1
        %s161 = scalar_lea.sflag [#allocation4], %s160
        %s162 = sand.u32 %s93, 1
        %s163 = smul.addr %s162, 64
        %s164 = scalar_lea.vmem [#allocation3], %s163
        %s165 = smul.u32 8, %s17
        %p166 = scmp.lt.s32.totalorder %s165, 15
        %s167 = scalar_select %p166, %s165, 15
        %s168 = smul.addr %s167, 8
        %s169 = scalar_lea.vmem %s2, %s168
        %s170 = smul.u32 8, %s17
        %s171 = smul.u32 8, %s17
        %v172 = vld [vmem:[%s169] sm:$0xff]
        %v173 = vld [vmem:[%s169 + $0x8] sm:$0xff]
        %v174 = vld [vmem:[%s169 + $0x10] sm:$0xff]
        %v175 = vld [vmem:[%s169 + $0x18] sm:$0xff]
        %v176 = vld [vmem:[%s169 + $0x20] sm:$0xff]
        %v177 = vld [vmem:[%s169 + $0x28] sm:$0xff]
        %v178 = vld [vmem:[%s169 + $0x30] sm:$0xff]
        %v179 = vld [vmem:[%s169 + $0x38] sm:$0xff]
        %v180 = vld [vmem:[%s1] sm:$0xff]
        %v181 = vld [vmem:[%s1 + $0x8] sm:$0xff]
        %vm182 = vcmask 130048
        %v184 = vsel %vm182, %v172, 0
        %v187 = vsel %vm182, %v173, 0
        %v190 = vsel %vm182, %v174, 0
        %v193 = vsel %vm182, %v175, 0
        %v196 = vsel %vm182, %v176, 0
        %v199 = vsel %vm182, %v177, 0
        %v202 = vsel %vm182, %v178, 0
        %v205 = vsel %vm182, %v179, 0
        %207 = vmatpush.msra.mxu0 0.0
        %208 = vmatpush.msra.mxu0 0.0
        %209 = vmatpush.msra.mxu0 0.0
        %210 = vmatpush.msra.mxu0 0.0
        %211 = vmatpush.msra.mxu0 0.0
        %212 = vmatpush.msra.mxu0 0.0
        %213 = vmatpush.msra.mxu0 0.0
        %214 = vmatpush.msra.mxu0 0.0
        %215 = vmatpush.msra.mxu0 0.0
        %216 = vmatpush.msra.mxu0 0.0
        %217 = vmatpush.msra.mxu0 0.0
        %218 = vmatpush.msra.mxu0 0.0
        %219 = vmatpush.msra.mxu0 0.0
        %220 = vmatpush.msra.mxu0 0.0
        %221 = vmatpush.msra.mxu0 %v181
        %222 = vmatpush.msra.mxu0 %v180
        %223 = vmatmul.f32.gmra.mxu0 %v184
        %v224 = vpop.f32.mrf.mxu0
        %v225 = vadd.f32 0.0, %v224
        %226 = vmatmul.f32.gmra.mxu0 %v187
        %v227 = vpop.f32.mrf.mxu0
        %v228 = vadd.f32 0.0, %v227
        %229 = vmatmul.f32.gmra.mxu0 %v190
        %v230 = vpop.f32.mrf.mxu0
        %v231 = vadd.f32 0.0, %v230
        %232 = vmatmul.f32.gmra.mxu0 %v193
        %v233 = vpop.f32.mrf.mxu0
        %v234 = vadd.f32 0.0, %v233
        %235 = vmatmul.f32.gmra.mxu0 %v196
        %v236 = vpop.f32.mrf.mxu0
        %v237 = vadd.f32 0.0, %v236
        %238 = vmatmul.f32.gmra.mxu0 %v199
        %v239 = vpop.f32.mrf.mxu0
        %v240 = vadd.f32 0.0, %v239
        %241 = vmatmul.f32.gmra.mxu0 %v202
        %v242 = vpop.f32.mrf.mxu0
        %v243 = vadd.f32 0.0, %v242
        %244 = vmatmul.f32.gmra.mxu0 %v205
        %v245 = vpop.f32.mrf.mxu0
        %v246 = vadd.f32 0.0, %v245
        %247 = vdwg.mxu0
        %248 = vst.msk [vmem:[#allocation2] sm:$0xff] %vm182, %v225
        %249 = vst.msk [vmem:[#allocation2 + $0x8] sm:$0xff] %vm182, %v228
        %250 = vst.msk [vmem:[#allocation2 + $0x10] sm:$0xff] %vm182, %v231
        %251 = vst.msk [vmem:[#allocation2 + $0x18] sm:$0xff] %vm182, %v234
        %252 = vst.msk [vmem:[#allocation2 + $0x20] sm:$0xff] %vm182, %v237
        %253 = vst.msk [vmem:[#allocation2 + $0x28] sm:$0xff] %vm182, %v240
        %254 = vst.msk [vmem:[#allocation2 + $0x30] sm:$0xff] %vm182, %v243
        %255 = vst.msk [vmem:[#allocation2 + $0x38] sm:$0xff] %vm182, %v246
        %v256 = vld [vmem:[%s0] sm:$0xff]
        %v257 = vld [vmem:[%s0 + $0x8] sm:$0xff]
        %v258 = vld [vmem:[#allocation2] sm:$0xff]
        %v259 = vld [vmem:[#allocation2 + $0x8] sm:$0xff]
        %v261 = vsel %vm182, %v256, 0
        %v264 = vsel %vm182, %v257, 0
        %266 = vmatpush.msra.mxu0 0.0
        %267 = vmatpush.msra.mxu0 0.0
        %268 = vmatpush.msra.mxu0 0.0
        %269 = vmatpush.msra.mxu0 0.0
        %270 = vmatpush.msra.mxu0 0.0
        %271 = vmatpush.msra.mxu0 0.0
        %272 = vmatpush.msra.mxu0 0.0
        %273 = vmatpush.msra.mxu0 0.0
        %274 = vmatpush.msra.mxu0 0.0
        %275 = vmatpush.msra.mxu0 0.0
        %276 = vmatpush.msra.mxu0 0.0
        %277 = vmatpush.msra.mxu0 0.0
        %278 = vmatpush.msra.mxu0 0.0
        %279 = vmatpush.msra.mxu0 0.0
        %280 = vmatpush.msra.mxu0 %v259
        %281 = vmatpush.msra.mxu0 %v258
        %282 = vmatmul.f32.gmra.mxu0 %v261
        %v283 = vpop.f32.mrf.mxu0
        %v284 = vadd.f32 0.0, %v283
        %285 = vmatmul.f32.gmra.mxu0 %v264
        %v286 = vpop.f32.mrf.mxu0
        %v287 = vadd.f32 0.0, %v286
        %288 = vdwg.mxu0
        %289 = vst.msk [vmem:[%s164] sm:$0xff] %vm182, %v284
        %290 = vst.msk [vmem:[%s164 + $0x8] sm:$0xff] %vm182, %v287
        %v291 = vld [vmem:[%s0] sm:$0xff]
        %v292 = vld [vmem:[%s0 + $0x8] sm:$0xff]
        %v293 = vld [vmem:[#allocation2 + $0x10] sm:$0xff]
        %v294 = vld [vmem:[#allocation2 + $0x18] sm:$0xff]
        %v296 = vsel %vm182, %v291, 0
        %v299 = vsel %vm182, %v292, 0
        %301 = vmatpush.msra.mxu0 0.0
        %302 = vmatpush.msra.mxu0 0.0
        %303 = vmatpush.msra.mxu0 0.0
        %304 = vmatpush.msra.mxu0 0.0
        %305 = vmatpush.msra.mxu0 0.0
        %306 = vmatpush.msra.mxu0 0.0
        %307 = vmatpush.msra.mxu0 0.0
        %308 = vmatpush.msra.mxu0 0.0
        %309 = vmatpush.msra.mxu0 0.0
        %310 = vmatpush.msra.mxu0 0.0
        %311 = vmatpush.msra.mxu0 0.0
        %312 = vmatpush.msra.mxu0 0.0
        %313 = vmatpush.msra.mxu0 0.0
        %314 = vmatpush.msra.mxu0 0.0
        %315 = vmatpush.msra.mxu0 %v294
        %316 = vmatpush.msra.mxu0 %v293
        %317 = vmatmul.f32.gmra.mxu0 %v296
        %v318 = vpop.f32.mrf.mxu0
        %v319 = vadd.f32 0.0, %v318
        %320 = vmatmul.f32.gmra.mxu0 %v299
        %v321 = vpop.f32.mrf.mxu0
        %v322 = vadd.f32 0.0, %v321
        %323 = vdwg.mxu0
        %324 = vst.msk [vmem:[%s164 + $0x10] sm:$0xff] %vm182, %v319
        %325 = vst.msk [vmem:[%s164 + $0x18] sm:$0xff] %vm182, %v322
        %v326 = vld [vmem:[%s0] sm:$0xff]
        %v327 = vld [vmem:[%s0 + $0x8] sm:$0xff]
        %v328 = vld [vmem:[#allocation2 + $0x20] sm:$0xff]
        %v329 = vld [vmem:[#allocation2 + $0x28] sm:$0xff]
        %v331 = vsel %vm182, %v326, 0
        %v334 = vsel %vm182, %v327, 0
        %336 = vmatpush.msra.mxu0 0.0
        %337 = vmatpush.msra.mxu0 0.0
        %338 = vmatpush.msra.mxu0 0.0
        %339 = vmatpush.msra.mxu0 0.0
        %340 = vmatpush.msra.mxu0 0.0
        %341 = vmatpush.msra.mxu0 0.0
        %342 = vmatpush.msra.mxu0 0.0
        %343 = vmatpush.msra.mxu0 0.0
        %344 = vmatpush.msra.mxu0 0.0
        %345 = vmatpush.msra.mxu0 0.0
        %346 = vmatpush.msra.mxu0 0.0
        %347 = vmatpush.msra.mxu0 0.0
        %348 = vmatpush.msra.mxu0 0.0
        %349 = vmatpush.msra.mxu0 0.0
        %350 = vmatpush.msra.mxu0 %v329
        %351 = vmatpush.msra.mxu0 %v328
        %352 = vmatmul.f32.gmra.mxu0 %v331
        %v353 = vpop.f32.mrf.mxu0
        %v354 = vadd.f32 0.0, %v353
        %355 = vmatmul.f32.gmra.mxu0 %v334
        %v356 = vpop.f32.mrf.mxu0
        %v357 = vadd.f32 0.0, %v356
        %358 = vdwg.mxu0
        %359 = vst.msk [vmem:[%s164 + $0x20] sm:$0xff] %vm182, %v354
        %360 = vst.msk [vmem:[%s164 + $0x28] sm:$0xff] %vm182, %v357
        %v361 = vld [vmem:[%s0] sm:$0xff]
        %v362 = vld [vmem:[%s0 + $0x8] sm:$0xff]
        %v363 = vld [vmem:[#allocation2 + $0x30] sm:$0xff]
        %v364 = vld [vmem:[#allocation2 + $0x38] sm:$0xff]
        %v366 = vsel %vm182, %v361, 0
        %v369 = vsel %vm182, %v362, 0
        %371 = vmatpush.msra.mxu0 0.0
        %372 = vmatpush.msra.mxu0 0.0
        %373 = vmatpush.msra.mxu0 0.0
        %374 = vmatpush.msra.mxu0 0.0
        %375 = vmatpush.msra.mxu0 0.0
        %376 = vmatpush.msra.mxu0 0.0
        %377 = vmatpush.msra.mxu0 0.0
        %378 = vmatpush.msra.mxu0 0.0
        %379 = vmatpush.msra.mxu0 0.0
        %380 = vmatpush.msra.mxu0 0.0
        %381 = vmatpush.msra.mxu0 0.0
        %382 = vmatpush.msra.mxu0 0.0
        %383 = vmatpush.msra.mxu0 0.0
        %384 = vmatpush.msra.mxu0 0.0
        %385 = vmatpush.msra.mxu0 %v364
        %386 = vmatpush.msra.mxu0 %v363
        %387 = vmatmul.f32.gmra.mxu0 %v366
        %v388 = vpop.f32.mrf.mxu0
        %v389 = vadd.f32 0.0, %v388
        %390 = vmatmul.f32.gmra.mxu0 %v369
        %v391 = vpop.f32.mrf.mxu0
        %v392 = vadd.f32 0.0, %v391
        %393 = vdwg.mxu0
        %394 = vst.msk [vmem:[%s164 + $0x30] sm:$0xff] %vm182, %v389
        %395 = vst.msk [vmem:[%s164 + $0x38] sm:$0xff] %vm182, %v392
        %s396 = sand.u32 %s93, 1
        %s397 = scalar_lea.sflag [#allocation4], %s396
        %s398 = sand.u32 %s93, 1
        %s399 = smul.addr %s398, 64
        %s400 = scalar_lea.vmem [#allocation3], %s399
        // Predicated region
        $region33: #{my_blur.1} parent=31 // pred_check
          %p401 = pneg %p103
        $region34: #{my_blur.1} parent=31 // pred_check_branch
          %403 = sbr.rel (%p401) target = $region36
        $region35: #{my_blur.1} parent=31 // pred_region
          %s404 = smul.u32 8, %s17
          %406 = vsyncadd %s397, 0
          %s407 = smul.addr %s404, 8
          %s408 = scalar_lea.hbm %s3, %s407
          %s409 = sshll.u32 %s400, 4
          %s410 = int_to_ptr.vmem [resolvable:$true] %s409
          %s411 = sshll.u32 %s408, 4
          %s412 = int_to_ptr.hbm [resolvable:$true] %s411
          %417 = dma.vmem_to_hbm [thread:$0]  %s410, 1024, %s412, %s397, 128, 128, 8
        $region36: #{my_blur.1} parent=31 // pred_fallthru
          _
      $region32: #{my_blur.1} parent=5 // pred_fallthru
        _
      %p418 = scmp.le.s32.totalorder 2, %s12
      // Predicated region
      $region37: #{my_blur.1} parent=5 // pred_check
        %p419 = pneg %p418
      $region38: #{my_blur.1} parent=5 // pred_check_branch
        %421 = sbr.rel (%p419) target = $region40
      $region39: #{my_blur.1} parent=5 // pred_region
        %s422 = ssub.s32 %s12, 2
        // Predicated region
        $region41: #{my_blur.1} parent=39 // pred_check
          %p423 = pneg %p109
        $region42: #{my_blur.1} parent=39 // pred_check_branch
          %425 = sbr.rel (%p423) target = $region44
        $region43: #{my_blur.1} parent=39 // pred_region
          %s426 = sand.u32 %s94, 1
          %s427 = scalar_lea.sflag [#allocation4], %s426
          %s428 = sand.u32 %s94, 1
          %s429 = smul.addr %s428, 64
          %s430 = scalar_lea.vmem [#allocation3], %s429
          %432 = dma.done %s427, 1024
        $region44: #{my_blur.1} parent=39 // pred_fallthru
          _
      $region40: #{my_blur.1} parent=5 // pred_fallthru
        _
    $region6: #{my_blur.1} parent=1 // loop_footer
      %s16 = sadd.s32 1, %s12
    $region7: #{my_blur.1} parent=1 // loop_footer_branch
      %11 = sbr.rel target = $region3
    $region8: #{my_blur.1} parent=1 // loop_exit
      _
    %433 = vsyncpa [#allocation4], 1
    %s434 = scalar_lea.sflag [#allocation4], 1
    %435 = vsyncpa %s434, 1

</llo_original>
